<compile_context>
chip_gen: v5e
topology: v5e:2x2
jax: 0.10.0
libtpu: 0.0.40
codegen_flags: <defaults>
</compile_context>

<pallas_src>
import functools

import jax
import jax.numpy as jnp
from jax.experimental import pallas as pl
from jax.experimental.pallas import tpu as pltpu

LANE = 128
SUBLANE = 8


def _round_up(n, m):
    return ((n + m - 1) // m) * m


def _cdiv(a, b):
    return (a + b - 1) // b


def _itemsize(dt):
    return jnp.dtype(dt).itemsize


def _padded_bytes(shape, dtype):
    """Approx. VMEM footprint of a 2-D block after (8, 128) layout padding."""
    r, c = shape
    return _round_up(max(r, 1), SUBLANE) * _round_up(max(c, 1), LANE) * _itemsize(dtype)


def _default_compute_dtype():
    """bf16 MXU operands on v6e/v7x (keeps the kernel HBM-bound); f32 on v5e."""
    try:
        kind = jax.devices()[0].device_kind.lower()
    except Exception:
        return jnp.bfloat16
    if "v5 lite" in kind or "v5e" in kind or "v5lite" in kind:
        return jnp.float32
    return jnp.bfloat16


def autoencoder_kernel(x_ref,
                       w1_ref, w2_ref, w3_ref, w4_ref, w5_ref, w6_ref,
                       b_ref,
                       o_ref,
                       *, dims, compute_dtype):
    """One batch tile: the fully fused 6-layer encoder/decoder chain."""
    d, h1, h2, z_dim = dims
    f32 = jnp.float32

    def to_operand(h):
        # Only cast when the MXU operand dtype differs from the f32 chain.
        return h if compute_dtype == f32 else h.astype(compute_dtype)

    def dense(h, w_ref, row, out_dim):
        # Bias rows are zero-padded to the pack width; slice live columns only.
        b = b_ref[row:row + 1, :out_dim]
        # Weights are pre-cast in the wrapper; accumulate in f32 on the MXU.
        return jnp.dot(h, w_ref[...], preferred_element_type=f32) + b

    # Single cast of the input tile (no-op when dtypes already match).
    x = x_ref[...].astype(compute_dtype)

    # ---- encoder ----
    h = jnp.maximum(dense(x, w1_ref, 0, h1), 0.0)                 # Linear + ReLU
    h = jnp.maximum(dense(to_operand(h), w2_ref, 1, h2), 0.0)     # Linear + ReLU
    z = dense(to_operand(h), w3_ref, 2, z_dim)                    # Linear
    z = jnp.where(z > 0, z, 0.1 * z)                              # LeakyReLU(0.1)

    # ---- decoder ----
    h = jnp.maximum(dense(to_operand(z), w4_ref, 3, h2), 0.0)     # Linear + ReLU
    h = jnp.maximum(dense(to_operand(h), w5_ref, 4, h1), 0.0)     # Linear + ReLU
    y = dense(to_operand(h), w6_ref, 5, d)                        # Linear
    o_ref[...] = jnp.tanh(y).astype(o_ref.dtype)                  # Tanh


def autoencoder_forward(x, params, *, block_b=2048, compute_dtype=None,
                        out_dtype=None):
    """x: [B, d]; params: list of (W [in, out], b [1, out]) for 6 layers."""
    B, d = x.shape
    (w1, b1), (w2, b2), (w3, b3), (w4, b4), (w5, b5), (w6, b6) = params
    h1 = w1.shape[1]
    h2 = w2.shape[1]
    z_dim = w3.shape[1]

    if compute_dtype is None:
        compute_dtype = _default_compute_dtype()
    if out_dtype is None:
        out_dtype = x.dtype

    # ---- batch tile sizing ------------------------------------------------
    # Big tiles amortize the ~0.35 us per-grid-step overhead (HBM-bound kernel);
    # keep >=4 grid steps on large batches (pipelining / v7x 2-TC split) and
    # respect a ~24 MiB VMEM budget for double-buffered I/O + live activations.
    tb = min(block_b, B)
    if B >= 4 * 256 and _cdiv(B, tb) < 4:
        tb = max(256, _cdiv(B, 4))
    row_bytes = (_round_up(d, LANE) * 2 * (_itemsize(x.dtype) + _itemsize(out_dtype))
                 + (_round_up(d, LANE) + _round_up(h1, LANE)
                    + _round_up(h2, LANE) + LANE) * 4 * 2)
    tb_cap = max(SUBLANE, ((24 << 20) // row_bytes) // SUBLANE * SUBLANE)
    tb = min(tb, tb_cap)
    if tb >= B:
        tb = B                                    # single full-extent block (any B legal)
    else:
        tb = max(SUBLANE, (tb // SUBLANE) * SUBLANE)   # sub-full blocks: multiple of 8
    grid_b = _cdiv(B, tb)                         # ragged last block handled by Pallas

    # ---- pack the 6 biases into a single f32 [6, bw] array (1 DMA, not 6) --
    bw = max(h1, h2, z_dim, d)

    def pad_bias(b):
        b = b.reshape(1, -1).astype(jnp.float32)
        return jnp.pad(b, ((0, 0), (0, bw - b.shape[1])))

    bias_pack = jnp.concatenate(
        [pad_bias(b) for b in (b1, b2, b3, b4, b5, b6)], axis=0)

    # Weights pre-cast once in the wrapper (no per-layer re-cast in the kernel).
    weights = [w.astype(compute_dtype) for w in (w1, w2, w3, w4, w5, w6)]

    # ---- specs -------------------------------------------------------------
    x_spec = pl.BlockSpec((tb, d), lambda i: (i, 0))
    o_spec = pl.BlockSpec((tb, d), lambda i: (i, 0))

    def const_spec(arr):
        # Full-array block + constant index_map -> VMEM-resident, fetched once.
        return pl.BlockSpec(arr.shape, lambda i: (0, 0))

    in_specs = [x_spec] + [const_spec(w) for w in weights] + [const_spec(bias_pack)]

    # ---- VMEM estimate (dtype- and layout-aware); only raise limit if needed.
    w_vmem = (sum(_padded_bytes(w.shape, compute_dtype) for w in weights)
              + _padded_bytes(bias_pack.shape, jnp.float32))
    io_vmem = 2 * (_padded_bytes((tb, d), x.dtype) + _padded_bytes((tb, d), out_dtype))
    act_vmem = (_round_up(d, LANE) + _round_up(h1, LANE)
                + _round_up(h2, LANE) + LANE) * tb * 4 * 2
    est = w_vmem + io_vmem + act_vmem + (1 << 20)

    # TODO(synk): on v7x, if profiling shows a single active TensorCore, switch
    # the batch axis to pltpu.CORE_PARALLEL.
    compiler_kwargs = dict(dimension_semantics=("parallel",))
    if est > (30 << 20):
        compiler_kwargs["vmem_limit_bytes"] = int(min(est + (4 << 20), 48 << 20))

    kernel = functools.partial(
        autoencoder_kernel,
        dims=(d, h1, h2, z_dim),
        compute_dtype=compute_dtype,
    )

    out = pl.pallas_call(
        kernel,
        out_shape=jax.ShapeDtypeStruct((B, d), out_dtype),
        grid=(grid_b,),
        in_specs=in_specs,
        out_specs=o_spec,
        compiler_params=pltpu.CompilerParams(**compiler_kwargs),
    )(x, *weights, bias_pack)
    return out


def init_params(key, d, dtype=jnp.float32):
    """Synthetic init matching nn.Linear shapes ([out, in] stored as [in, out])."""
    h1 = d // 2
    h2 = h1 // 2
    dims = [(d, h1), (h1, h2), (h2, 4),      # encoder
            (4, h2), (h2, h1), (h1, d)]      # decoder
    params = []
    for (fan_in, fan_out) in dims:
        key, kw, kb = jax.random.split(key, 3)
        bound = 1.0 / jnp.sqrt(fan_in)
        w = jax.random.uniform(kw, (fan_in, fan_out), dtype, -bound, bound)
        b = jax.random.uniform(kb, (1, fan_out), dtype, -bound, bound)
        params.append((w, b))
    return params


def _reference(x, params):
    (w1, b1), (w2, b2), (w3, b3), (w4, b4), (w5, b5), (w6, b6) = params
    h = jnp.maximum(x @ w1 + b1, 0.0)
    h = jnp.maximum(h @ w2 + b2, 0.0)
    z = h @ w3 + b3
    z = jnp.where(z > 0, z, 0.1 * z)
    h = jnp.maximum(z @ w4 + b4, 0.0)
    h = jnp.maximum(h @ w5 + b5, 0.0)
    return jnp.tanh(h @ w6 + b6)


if __name__ == "__main__":
    key = jax.random.PRNGKey(0)
    d = 64                      # -> hidden_dim_1 = 32, hidden_dim_2 = 16, latent = 4
    B = 512
    kx, kp = jax.random.split(key)
    x = jax.random.normal(kx, (B, d), dtype=jnp.float32)
    params = init_params(kp, d)

    expected = _reference(x, params)

    # f32 operand path with a multi-step grid (tb=128 -> 4 grid steps)
    out_f32 = autoencoder_forward(x, params, block_b=128, compute_dtype=jnp.float32)
    jax.block_until_ready(out_f32)
    assert out_f32.shape == (B, d)
    assert jnp.allclose(out_f32, expected, atol=1e-5, rtol=1e-5)

    # ragged batch: 100 rows with tb=64 -> blocks of 64 + partial 36 (masked write)
    out_ragged = autoencoder_forward(x[:100], params, block_b=64,
                                     compute_dtype=jnp.float32)
    jax.block_until_ready(out_ragged)
    assert out_ragged.shape == (100, d)
    assert jnp.allclose(out_ragged, expected[:100], atol=1e-5, rtol=1e-5)

    # default path: large tile, chip-appropriate compute dtype (bf16 on v6e/v7x)
    out_def = autoencoder_forward(x, params)
    jax.block_until_ready(out_def)
    assert out_def.shape == (B, d)
    assert jnp.allclose(out_def, expected, atol=3e-2, rtol=3e-2)

    # bf16 I/O fast path (halves x/o HBM traffic); f32 accumulation inside
    out_bf16 = autoencoder_forward(x.astype(jnp.bfloat16), params,
                                   compute_dtype=jnp.bfloat16)
    jax.block_until_ready(out_bf16)
    assert out_bf16.shape == (B, d)
    assert out_bf16.dtype == jnp.bfloat16
    assert jnp.allclose(out_bf16.astype(jnp.float32), expected,
                        atol=5e-2, rtol=5e-2)

    print("KERNEL_OK")
</pallas_src>

<mosaic_0001>
module attributes {stable_mosaic.version = 11 : i64} {
  func.func @autoencoder_kernel(%arg0: i32, %arg1: memref<128x64xf32, #tpu.memory_space<vmem>>, %arg2: memref<64x32xf32, #tpu.memory_space<vmem>>, %arg3: memref<32x16xf32, #tpu.memory_space<vmem>>, %arg4: memref<16x4xf32, #tpu.memory_space<vmem>>, %arg5: memref<4x16xf32, #tpu.memory_space<vmem>>, %arg6: memref<16x32xf32, #tpu.memory_space<vmem>>, %arg7: memref<32x64xf32, #tpu.memory_space<vmem>>, %arg8: memref<6x64xf32, #tpu.memory_space<vmem>>, %arg9: memref<128x64xf32, #tpu.memory_space<vmem>>) attributes {dimension_semantics = [#tpu.dimension_semantics<parallel>], iteration_bounds = array<i64: 4>, scalar_prefetch = 0 : i64, scratch_operands = 0 : i64, tpu.core_type = #tpu.core_type<tc>, window_params = [{transform_indices = @transform_0, window_bounds = array<i64: 128, 64>}, {pipeline_mode = #tpu.pipeline_mode<synchronous>, transform_indices = @transform_1, window_bounds = array<i64: 64, 32>}, {pipeline_mode = #tpu.pipeline_mode<synchronous>, transform_indices = @transform_2, window_bounds = array<i64: 32, 16>}, {pipeline_mode = #tpu.pipeline_mode<synchronous>, transform_indices = @transform_3, window_bounds = array<i64: 16, 4>}, {pipeline_mode = #tpu.pipeline_mode<synchronous>, transform_indices = @transform_4, window_bounds = array<i64: 4, 16>}, {pipeline_mode = #tpu.pipeline_mode<synchronous>, transform_indices = @transform_5, window_bounds = array<i64: 16, 32>}, {pipeline_mode = #tpu.pipeline_mode<synchronous>, transform_indices = @transform_6, window_bounds = array<i64: 32, 64>}, {pipeline_mode = #tpu.pipeline_mode<synchronous>, transform_indices = @transform_7, window_bounds = array<i64: 6, 64>}, {transform_indices = @transform_8, window_bounds = array<i64: 128, 64>}]} {
    %c0 = arith.constant 0 : index
    %c0_0 = arith.constant 0 : index
    %0 = vector.load %arg1[%c0, %c0_0] : memref<128x64xf32, #tpu.memory_space<vmem>>, vector<128x64xf32>
    %c0_1 = arith.constant 0 : index
    %c0_2 = arith.constant 0 : index
    %1 = vector.load %arg8[%c0_1, %c0_2] : memref<6x64xf32, #tpu.memory_space<vmem>>, vector<1x32xf32>
    %c0_3 = arith.constant 0 : index
    %c0_4 = arith.constant 0 : index
    %2 = vector.load %arg2[%c0_3, %c0_4] : memref<64x32xf32, #tpu.memory_space<vmem>>, vector<64x32xf32>
    %cst = arith.constant dense<0.000000e+00> : vector<128x32xf32>
    %3 = tpu.matmul %0, %2, %cst {dimension_numbers = #tpu.dot_dimension_numbers<[1], [0], [0], [1], [0, 0, 1, 1], [], []>} : vector<128x64xf32>, vector<64x32xf32>, vector<128x32xf32> -> vector<128x32xf32>
    %4 = vector.broadcast %1 : vector<1x32xf32> to vector<128x32xf32>
    %5 = arith.addf %3, %4 : vector<128x32xf32>
    %cst_5 = arith.constant 0.000000e+00 : f32
    %6 = vector.broadcast %cst_5 : f32 to vector<128x32xf32>
    %7 = arith.maximumf %5, %6 : vector<128x32xf32>
    %c1 = arith.constant 1 : index
    %c0_6 = arith.constant 0 : index
    %8 = vector.load %arg8[%c1, %c0_6] : memref<6x64xf32, #tpu.memory_space<vmem>>, vector<1x16xf32>
    %c0_7 = arith.constant 0 : index
    %c0_8 = arith.constant 0 : index
    %9 = vector.load %arg3[%c0_7, %c0_8] : memref<32x16xf32, #tpu.memory_space<vmem>>, vector<32x16xf32>
    %cst_9 = arith.constant dense<0.000000e+00> : vector<128x16xf32>
    %10 = tpu.matmul %7, %9, %cst_9 {dimension_numbers = #tpu.dot_dimension_numbers<[1], [0], [0], [1], [0, 0, 1, 1], [], []>} : vector<128x32xf32>, vector<32x16xf32>, vector<128x16xf32> -> vector<128x16xf32>
    %11 = vector.broadcast %8 : vector<1x16xf32> to vector<128x16xf32>
    %12 = arith.addf %10, %11 : vector<128x16xf32>
    %cst_10 = arith.constant 0.000000e+00 : f32
    %13 = vector.broadcast %cst_10 : f32 to vector<128x16xf32>
    %14 = arith.maximumf %12, %13 : vector<128x16xf32>
    %c2 = arith.constant 2 : index
    %c0_11 = arith.constant 0 : index
    %15 = vector.load %arg8[%c2, %c0_11] : memref<6x64xf32, #tpu.memory_space<vmem>>, vector<1x4xf32>
    %c0_12 = arith.constant 0 : index
    %c0_13 = arith.constant 0 : index
    %16 = vector.load %arg4[%c0_12, %c0_13] : memref<16x4xf32, #tpu.memory_space<vmem>>, vector<16x4xf32>
    %cst_14 = arith.constant dense<0.000000e+00> : vector<128x4xf32>
    %17 = tpu.matmul %14, %16, %cst_14 {dimension_numbers = #tpu.dot_dimension_numbers<[1], [0], [0], [1], [0, 0, 1, 1], [], []>} : vector<128x16xf32>, vector<16x4xf32>, vector<128x4xf32> -> vector<128x4xf32>
    %18 = vector.broadcast %15 : vector<1x4xf32> to vector<128x4xf32>
    %19 = arith.addf %17, %18 : vector<128x4xf32>
    %cst_15 = arith.constant 0.000000e+00 : f32
    %20 = vector.broadcast %cst_15 : f32 to vector<128x4xf32>
    %21 = arith.cmpf ogt, %19, %20 : vector<128x4xf32>
    %cst_16 = arith.constant 1.000000e-01 : f32
    %22 = vector.broadcast %cst_16 : f32 to vector<128x4xf32>
    %23 = arith.mulf %22, %19 : vector<128x4xf32>
    %24 = arith.select %21, %19, %23 : vector<128x4xi1>, vector<128x4xf32>
    %c3 = arith.constant 3 : index
    %c0_17 = arith.constant 0 : index
    %25 = vector.load %arg8[%c3, %c0_17] : memref<6x64xf32, #tpu.memory_space<vmem>>, vector<1x16xf32>
    %c0_18 = arith.constant 0 : index
    %c0_19 = arith.constant 0 : index
    %26 = vector.load %arg5[%c0_18, %c0_19] : memref<4x16xf32, #tpu.memory_space<vmem>>, vector<4x16xf32>
    %cst_20 = arith.constant dense<0.000000e+00> : vector<128x16xf32>
    %27 = tpu.matmul %24, %26, %cst_20 {dimension_numbers = #tpu.dot_dimension_numbers<[1], [0], [0], [1], [0, 0, 1, 1], [], []>} : vector<128x4xf32>, vector<4x16xf32>, vector<128x16xf32> -> vector<128x16xf32>
    %28 = vector.broadcast %25 : vector<1x16xf32> to vector<128x16xf32>
    %29 = arith.addf %27, %28 : vector<128x16xf32>
    %cst_21 = arith.constant 0.000000e+00 : f32
    %30 = vector.broadcast %cst_21 : f32 to vector<128x16xf32>
    %31 = arith.maximumf %29, %30 : vector<128x16xf32>
    %c4 = arith.constant 4 : index
    %c0_22 = arith.constant 0 : index
    %32 = vector.load %arg8[%c4, %c0_22] : memref<6x64xf32, #tpu.memory_space<vmem>>, vector<1x32xf32>
    %c0_23 = arith.constant 0 : index
    %c0_24 = arith.constant 0 : index
    %33 = vector.load %arg6[%c0_23, %c0_24] : memref<16x32xf32, #tpu.memory_space<vmem>>, vector<16x32xf32>
    %cst_25 = arith.constant dense<0.000000e+00> : vector<128x32xf32>
    %34 = tpu.matmul %31, %33, %cst_25 {dimension_numbers = #tpu.dot_dimension_numbers<[1], [0], [0], [1], [0, 0, 1, 1], [], []>} : vector<128x16xf32>, vector<16x32xf32>, vector<128x32xf32> -> vector<128x32xf32>
    %35 = vector.broadcast %32 : vector<1x32xf32> to vector<128x32xf32>
    %36 = arith.addf %34, %35 : vector<128x32xf32>
    %cst_26 = arith.constant 0.000000e+00 : f32
    %37 = vector.broadcast %cst_26 : f32 to vector<128x32xf32>
    %38 = arith.maximumf %36, %37 : vector<128x32xf32>
    %c5 = arith.constant 5 : index
    %c0_27 = arith.constant 0 : index
    %39 = vector.load %arg8[%c5, %c0_27] : memref<6x64xf32, #tpu.memory_space<vmem>>, vector<1x64xf32>
    %c0_28 = arith.constant 0 : index
    %c0_29 = arith.constant 0 : index
    %40 = vector.load %arg7[%c0_28, %c0_29] : memref<32x64xf32, #tpu.memory_space<vmem>>, vector<32x64xf32>
    %cst_30 = arith.constant dense<0.000000e+00> : vector<128x64xf32>
    %41 = tpu.matmul %38, %40, %cst_30 {dimension_numbers = #tpu.dot_dimension_numbers<[1], [0], [0], [1], [0, 0, 1, 1], [], []>} : vector<128x32xf32>, vector<32x64xf32>, vector<128x64xf32> -> vector<128x64xf32>
    %42 = vector.broadcast %39 : vector<1x64xf32> to vector<128x64xf32>
    %43 = arith.addf %41, %42 : vector<128x64xf32>
    %44 = math.tanh %43 : vector<128x64xf32>
    %c0_31 = arith.constant 0 : index
    %c0_32 = arith.constant 0 : index
    %45 = vector.load %arg9[%c0_31, %c0_32] : memref<128x64xf32, #tpu.memory_space<vmem>>, vector<128x64xf32>
    tpu.vector_store %arg9[%c0_31, %c0_32], %44 {strides = array<i32>} : memref<128x64xf32, #tpu.memory_space<vmem>>, vector<128x64xf32>,
    return
  }
  func.func @transform_0(%arg0: i32) -> (i32, i32) {
    %c0_i32 = arith.constant 0 : i32
    %c0_i32_0 = arith.constant 0 : i32
    return %arg0, %c0_i32 : i32, i32
  }
  func.func @transform_1(%arg0: i32) -> (i32, i32) {
    %c0_i32 = arith.constant 0 : i32
    %c0_i32_0 = arith.constant 0 : i32
    %c0_i32_1 = arith.constant 0 : i32
    return %c0_i32, %c0_i32_0 : i32, i32
  }
  func.func @transform_2(%arg0: i32) -> (i32, i32) {
    %c0_i32 = arith.constant 0 : i32
    %c0_i32_0 = arith.constant 0 : i32
    %c0_i32_1 = arith.constant 0 : i32
    return %c0_i32, %c0_i32_0 : i32, i32
  }
  func.func @transform_3(%arg0: i32) -> (i32, i32) {
    %c0_i32 = arith.constant 0 : i32
    %c0_i32_0 = arith.constant 0 : i32
    %c0_i32_1 = arith.constant 0 : i32
    return %c0_i32, %c0_i32_0 : i32, i32
  }
  func.func @transform_4(%arg0: i32) -> (i32, i32) {
    %c0_i32 = arith.constant 0 : i32
    %c0_i32_0 = arith.constant 0 : i32
    %c0_i32_1 = arith.constant 0 : i32
    return %c0_i32, %c0_i32_0 : i32, i32
  }
  func.func @transform_5(%arg0: i32) -> (i32, i32) {
    %c0_i32 = arith.constant 0 : i32
    %c0_i32_0 = arith.constant 0 : i32
    %c0_i32_1 = arith.constant 0 : i32
    return %c0_i32, %c0_i32_0 : i32, i32
  }
  func.func @transform_6(%arg0: i32) -> (i32, i32) {
    %c0_i32 = arith.constant 0 : i32
    %c0_i32_0 = arith.constant 0 : i32
    %c0_i32_1 = arith.constant 0 : i32
    return %c0_i32, %c0_i32_0 : i32, i32
  }
  func.func @transform_7(%arg0: i32) -> (i32, i32) {
    %c0_i32 = arith.constant 0 : i32
    %c0_i32_0 = arith.constant 0 : i32
    %c0_i32_1 = arith.constant 0 : i32
    return %c0_i32, %c0_i32_0 : i32, i32
  }
  func.func @transform_8(%arg0: i32) -> (i32, i32) {
    %c0_i32 = arith.constant 0 : i32
    %c0_i32_0 = arith.constant 0 : i32
    return %arg0, %c0_i32 : i32, i32
  }
}

</mosaic_0001>

<llo_original>
// kernel: tpu_custom_call.1
$region0: #{tpu_custom_call.1}
  #allocation0 [shape = 'u32[]', space=smem, size = 0x4, offset = 0x4, fixed_abs, tag = 'smem constant byte address 0x4 - core index']
  #allocation1 [shape = 'u32[72,128]{1,0:T(1,128)}', space=vmem, size = 0x9000, scoped, tag = 'internal scratch']
  %s0 = inlined_call_operand.vmem [shape: f32[512,64], index: 0, kind: input, shape index: {}]
  %s1 = inlined_call_operand.vmem [shape: f32[64,32], index: 1, kind: input, shape index: {}]
  %s2 = inlined_call_operand.vmem [shape: f32[32,16], index: 2, kind: input, shape index: {}]
  %s3 = inlined_call_operand.vmem [shape: f32[16,4], index: 3, kind: input, shape index: {}]
  %s4 = inlined_call_operand.vmem [shape: f32[4,16], index: 4, kind: input, shape index: {}]
  %s5 = inlined_call_operand.vmem [shape: f32[16,32], index: 5, kind: input, shape index: {}]
  %s6 = inlined_call_operand.vmem [shape: f32[32,64], index: 6, kind: input, shape index: {}]
  %s7 = inlined_call_operand.vmem [shape: f32[6,64], index: 7, kind: input, shape index: {}]
  %s8 = inlined_call_operand.vmem [shape: f32[512,64], index: 8, kind: output, shape index: {}]
  %s9 = sld [smem:[#allocation0]]
  $region65: #{tpu_custom_call.1} parent=0
    _
  %s11 = ssub.s32 1, %s9
  %s12 = scalar_select 0, %s11, %s9
  loop: start=0, step=1, limit=6
  $region2: #{tpu_custom_call.1} parent=0 // loop_pre_header
    _
  $region3: #{tpu_custom_call.1} parent=0 // loop_header
    %s14 = sphi 0, %s18
    %p15 = scmp.ge.s32.totalorder %s14, 6
    %s24 = sphi 0, %s26
    %s27 = sphi 0, %s24
    %s28 = sphi 0, %s27
    %s44 = sphi 0, %s28
    %s48 = sphi 0, %s48
    %s50 = sphi 0, %s48
    %s51 = sphi 0, %s50
    %s65 = sphi 0, %s51
    %s69 = sphi 0, %s69
    %s71 = sphi 0, %s69
    %s72 = sphi 0, %s71
    %s86 = sphi 0, %s72
    %s90 = sphi 0, %s90
    %s92 = sphi 0, %s90
    %s93 = sphi 0, %s92
    %s107 = sphi 0, %s93
    %s111 = sphi 0, %s111
    %s113 = sphi 0, %s111
    %s114 = sphi 0, %s113
    %s128 = sphi 0, %s114
    %s132 = sphi 0, %s132
    %s134 = sphi 0, %s132
    %s135 = sphi 0, %s134
    %s149 = sphi 0, %s135
    %s153 = sphi 0, %s153
    %s155 = sphi 0, %s153
    %s156 = sphi 0, %s155
    %s170 = sphi 0, %s156
    %s174 = sphi 0, %s174
    %s176 = sphi 0, %s174
    %s177 = sphi 0, %s176
    %s191 = sphi 0, %s177
    %s197 = sphi 0, %s199
    %s200 = sphi 0, %s197
    %s201 = sphi 0, %s200
    %s217 = sphi 0, %s201
  $region4: #{tpu_custom_call.1} parent=0 // loop_header_branch
    %17 = sbr.rel (%p15) target = $region8
  $region5: #{tpu_custom_call.1} parent=0 // loop_body
    %s19 = ssub.s32 %s14, 1
    %s20 = ssub.s32 %s14, 2
    %s21 = sadd.s32 %s14, 1
    %s22 = ssub.s32 %s14, %s21
    %p23 = scmp.eq.s32.totalorder %s22, 0
    %s25 = sadd.s32 %s24, 1
    %s26 = scalar_select %p23, %s24, %s25
    %p29 = pneg %p23
    %p30 = scmp.eq.s32.totalorder %s14, 3
    %p31 = por %p29, %p30
    %p32 = scmp.ne.s32.totalorder %s24, %s27
    %p33 = scmp.eq.s32.totalorder %s14, 0
    %p34 = por %p32, %p33
    %p35 = scmp.ne.s32.totalorder %s24, %s27
    %p36 = scmp.eq.s32.totalorder %s19, 3
    %p37 = por %p35, %p36
    %p38 = scmp.ne.s32.totalorder %s27, %s28
    %p39 = scmp.eq.s32.totalorder %s19, 0
    %p40 = por %p38, %p39
    %p41 = scmp.ne.s32.totalorder %s27, %s28
    %p42 = scmp.eq.s32.totalorder %s20, 3
    %p43 = por %p41, %p42
    %p45 = scmp.ne.s32.totalorder %s28, %s44
    %p46 = scmp.eq.s32.totalorder %s20, 0
    %p47 = por %p45, %p46
    %s49 = sadd.s32 %s48, 1
    %p52 = scmp.eq.s32.totalorder %s14, 3
    %p53 = scmp.ne.s32.totalorder %s48, %s50
    %p54 = scmp.eq.s32.totalorder %s14, 0
    %p55 = por %p53, %p54
    %p56 = scmp.ne.s32.totalorder %s48, %s50
    %p57 = scmp.eq.s32.totalorder %s19, 3
    %p58 = por %p56, %p57
    %p59 = scmp.ne.s32.totalorder %s50, %s51
    %p60 = scmp.eq.s32.totalorder %s19, 0
    %p61 = por %p59, %p60
    %p62 = scmp.ne.s32.totalorder %s50, %s51
    %p63 = scmp.eq.s32.totalorder %s20, 3
    %p64 = por %p62, %p63
    %p66 = scmp.ne.s32.totalorder %s51, %s65
    %p67 = scmp.eq.s32.totalorder %s20, 0
    %p68 = por %p66, %p67
    %s70 = sadd.s32 %s69, 1
    %p73 = scmp.eq.s32.totalorder %s14, 3
    %p74 = scmp.ne.s32.totalorder %s69, %s71
    %p75 = scmp.eq.s32.totalorder %s14, 0
    %p76 = por %p74, %p75
    %p77 = scmp.ne.s32.totalorder %s69, %s71
    %p78 = scmp.eq.s32.totalorder %s19, 3
    %p79 = por %p77, %p78
    %p80 = scmp.ne.s32.totalorder %s71, %s72
    %p81 = scmp.eq.s32.totalorder %s19, 0
    %p82 = por %p80, %p81
    %p83 = scmp.ne.s32.totalorder %s71, %s72
    %p84 = scmp.eq.s32.totalorder %s20, 3
    %p85 = por %p83, %p84
    %p87 = scmp.ne.s32.totalorder %s72, %s86
    %p88 = scmp.eq.s32.totalorder %s20, 0
    %p89 = por %p87, %p88
    %s91 = sadd.s32 %s90, 1
    %p94 = scmp.eq.s32.totalorder %s14, 3
    %p95 = scmp.ne.s32.totalorder %s90, %s92
    %p96 = scmp.eq.s32.totalorder %s14, 0
    %p97 = por %p95, %p96
    %p98 = scmp.ne.s32.totalorder %s90, %s92
    %p99 = scmp.eq.s32.totalorder %s19, 3
    %p100 = por %p98, %p99
    %p101 = scmp.ne.s32.totalorder %s92, %s93
    %p102 = scmp.eq.s32.totalorder %s19, 0
    %p103 = por %p101, %p102
    %p104 = scmp.ne.s32.totalorder %s92, %s93
    %p105 = scmp.eq.s32.totalorder %s20, 3
    %p106 = por %p104, %p105
    %p108 = scmp.ne.s32.totalorder %s93, %s107
    %p109 = scmp.eq.s32.totalorder %s20, 0
    %p110 = por %p108, %p109
    %s112 = sadd.s32 %s111, 1
    %p115 = scmp.eq.s32.totalorder %s14, 3
    %p116 = scmp.ne.s32.totalorder %s111, %s113
    %p117 = scmp.eq.s32.totalorder %s14, 0
    %p118 = por %p116, %p117
    %p119 = scmp.ne.s32.totalorder %s111, %s113
    %p120 = scmp.eq.s32.totalorder %s19, 3
    %p121 = por %p119, %p120
    %p122 = scmp.ne.s32.totalorder %s113, %s114
    %p123 = scmp.eq.s32.totalorder %s19, 0
    %p124 = por %p122, %p123
    %p125 = scmp.ne.s32.totalorder %s113, %s114
    %p126 = scmp.eq.s32.totalorder %s20, 3
    %p127 = por %p125, %p126
    %p129 = scmp.ne.s32.totalorder %s114, %s128
    %p130 = scmp.eq.s32.totalorder %s20, 0
    %p131 = por %p129, %p130
    %s133 = sadd.s32 %s132, 1
    %p136 = scmp.eq.s32.totalorder %s14, 3
    %p137 = scmp.ne.s32.totalorder %s132, %s134
    %p138 = scmp.eq.s32.totalorder %s14, 0
    %p139 = por %p137, %p138
    %p140 = scmp.ne.s32.totalorder %s132, %s134
    %p141 = scmp.eq.s32.totalorder %s19, 3
    %p142 = por %p140, %p141
    %p143 = scmp.ne.s32.totalorder %s134, %s135
    %p144 = scmp.eq.s32.totalorder %s19, 0
    %p145 = por %p143, %p144
    %p146 = scmp.ne.s32.totalorder %s134, %s135
    %p147 = scmp.eq.s32.totalorder %s20, 3
    %p148 = por %p146, %p147
    %p150 = scmp.ne.s32.totalorder %s135, %s149
    %p151 = scmp.eq.s32.totalorder %s20, 0
    %p152 = por %p150, %p151
    %s154 = sadd.s32 %s153, 1
    %p157 = scmp.eq.s32.totalorder %s14, 3
    %p158 = scmp.ne.s32.totalorder %s153, %s155
    %p159 = scmp.eq.s32.totalorder %s14, 0
    %p160 = por %p158, %p159
    %p161 = scmp.ne.s32.totalorder %s153, %s155
    %p162 = scmp.eq.s32.totalorder %s19, 3
    %p163 = por %p161, %p162
    %p164 = scmp.ne.s32.totalorder %s155, %s156
    %p165 = scmp.eq.s32.totalorder %s19, 0
    %p166 = por %p164, %p165
    %p167 = scmp.ne.s32.totalorder %s155, %s156
    %p168 = scmp.eq.s32.totalorder %s20, 3
    %p169 = por %p167, %p168
    %p171 = scmp.ne.s32.totalorder %s156, %s170
    %p172 = scmp.eq.s32.totalorder %s20, 0
    %p173 = por %p171, %p172
    %s175 = sadd.s32 %s174, 1
    %p178 = scmp.eq.s32.totalorder %s14, 3
    %p179 = scmp.ne.s32.totalorder %s174, %s176
    %p180 = scmp.eq.s32.totalorder %s14, 0
    %p181 = por %p179, %p180
    %p182 = scmp.ne.s32.totalorder %s174, %s176
    %p183 = scmp.eq.s32.totalorder %s19, 3
    %p184 = por %p182, %p183
    %p185 = scmp.ne.s32.totalorder %s176, %s177
    %p186 = scmp.eq.s32.totalorder %s19, 0
    %p187 = por %p185, %p186
    %p188 = scmp.ne.s32.totalorder %s176, %s177
    %p189 = scmp.eq.s32.totalorder %s20, 3
    %p190 = por %p188, %p189
    %p192 = scmp.ne.s32.totalorder %s177, %s191
    %p193 = scmp.eq.s32.totalorder %s20, 0
    %p194 = por %p192, %p193
    %s195 = ssub.s32 %s14, %s21
    %p196 = scmp.eq.s32.totalorder %s195, 0
    %s198 = sadd.s32 %s197, 1
    %s199 = scalar_select %p196, %s197, %s198
    %p202 = pneg %p196
    %p203 = scmp.eq.s32.totalorder %s14, 3
    %p204 = por %p202, %p203
    %p205 = scmp.ne.s32.totalorder %s197, %s200
    %p206 = scmp.eq.s32.totalorder %s14, 0
    %p207 = por %p205, %p206
    %p208 = scmp.ne.s32.totalorder %s197, %s200
    %p209 = scmp.eq.s32.totalorder %s19, 3
    %p210 = por %p208, %p209
    %p211 = scmp.ne.s32.totalorder %s200, %s201
    %p212 = scmp.eq.s32.totalorder %s19, 0
    %p213 = por %p211, %p212
    %p214 = scmp.ne.s32.totalorder %s200, %s201
    %p215 = scmp.eq.s32.totalorder %s20, 3
    %p216 = por %p214, %p215
    %p218 = scmp.ne.s32.totalorder %s201, %s217
    %p219 = scmp.eq.s32.totalorder %s20, 0
    %p220 = por %p218, %p219
    %p221 = scmp.le.s32.totalorder 1, %s14
    %p222 = scmp.lt.s32.totalorder %s14, 5
    %p223 = pnand %p221, %p222
    %p224 = pneg %p223
    // Predicated region
    $region9: #{tpu_custom_call.1} parent=5 // pred_check
      _
    $region10: #{tpu_custom_call.1} parent=5 // pred_check_branch
      %226 = sbr.rel (%p223) target = $region12
    $region11: #{tpu_custom_call.1} parent=5 // pred_region
      %s227 = ssub.s32 %s14, 1
      // Predicated region
      $region13: #{tpu_custom_call.1} parent=11 // pred_check
        %p228 = pneg %p61
      $region14: #{tpu_custom_call.1} parent=11 // pred_check_branch
        %230 = sbr.rel (%p228) target = $region16
      $region15: #{tpu_custom_call.1} parent=11 // pred_region
        _
      $region16: #{tpu_custom_call.1} parent=11 // pred_fallthru
        _
      // Predicated region
      $region17: #{tpu_custom_call.1} parent=11 // pred_check
        %p231 = pneg %p82
      $region18: #{tpu_custom_call.1} parent=11 // pred_check_branch
        %233 = sbr.rel (%p231) target = $region20
      $region19: #{tpu_custom_call.1} parent=11 // pred_region
        _
      $region20: #{tpu_custom_call.1} parent=11 // pred_fallthru
        _
      // Predicated region
      $region21: #{tpu_custom_call.1} parent=11 // pred_check
        %p234 = pneg %p103
      $region22: #{tpu_custom_call.1} parent=11 // pred_check_branch
        %236 = sbr.rel (%p234) target = $region24
      $region23: #{tpu_custom_call.1} parent=11 // pred_region
        _
      $region24: #{tpu_custom_call.1} parent=11 // pred_fallthru
        _
      // Predicated region
      $region25: #{tpu_custom_call.1} parent=11 // pred_check
        %p237 = pneg %p124
      $region26: #{tpu_custom_call.1} parent=11 // pred_check_branch
        %239 = sbr.rel (%p237) target = $region28
      $region27: #{tpu_custom_call.1} parent=11 // pred_region
        _
      $region28: #{tpu_custom_call.1} parent=11 // pred_fallthru
        _
      // Predicated region
      $region29: #{tpu_custom_call.1} parent=11 // pred_check
        %p240 = pneg %p145
      $region30: #{tpu_custom_call.1} parent=11 // pred_check_branch
        %242 = sbr.rel (%p240) target = $region32
      $region31: #{tpu_custom_call.1} parent=11 // pred_region
        _
      $region32: #{tpu_custom_call.1} parent=11 // pred_fallthru
        _
      // Predicated region
      $region33: #{tpu_custom_call.1} parent=11 // pred_check
        %p243 = pneg %p166
      $region34: #{tpu_custom_call.1} parent=11 // pred_check_branch
        %245 = sbr.rel (%p243) target = $region36
      $region35: #{tpu_custom_call.1} parent=11 // pred_region
        _
      $region36: #{tpu_custom_call.1} parent=11 // pred_fallthru
        _
      // Predicated region
      $region37: #{tpu_custom_call.1} parent=11 // pred_check
        %p246 = pneg %p187
      $region38: #{tpu_custom_call.1} parent=11 // pred_check_branch
        %248 = sbr.rel (%p246) target = $region40
      $region39: #{tpu_custom_call.1} parent=11 // pred_region
        _
      $region40: #{tpu_custom_call.1} parent=11 // pred_fallthru
        _
    $region12: #{tpu_custom_call.1} parent=5 // pred_fallthru
      _
    %p249 = scmp.lt.s32.totalorder %s14, 4
    // Predicated region
    $region41: #{tpu_custom_call.1} parent=5 // pred_check
      %p250 = pneg %p249
    $region42: #{tpu_custom_call.1} parent=5 // pred_check_branch
      %252 = sbr.rel (%p250) target = $region44
    $region43: #{tpu_custom_call.1} parent=5 // pred_region
      // Predicated region
      $region45: #{tpu_custom_call.1} parent=43 // pred_check
        %p253 = pneg %p34
      $region46: #{tpu_custom_call.1} parent=43 // pred_check_branch
        %255 = sbr.rel (%p253) target = $region48
      $region47: #{tpu_custom_call.1} parent=43 // pred_region
        %s256 = smul.u32 16, %s14
        %p257 = scmp.lt.s32.totalorder %s256, 63
        %s258 = scalar_select %p257, %s256, 63
        %s259 = smul.addr %s258, 8
        %s260 = scalar_lea.vmem %s0, %s259
        %s261 = smul.u32 16, %s14
      $region48: #{tpu_custom_call.1} parent=43 // pred_fallthru
        _
    $region44: #{tpu_custom_call.1} parent=5 // pred_fallthru
      _
    %p262 = scmp.le.s32.totalorder 1, %s14
    %p263 = scmp.lt.s32.totalorder %s14, 5
    %p264 = pnand %p262, %p263
    %p265 = pneg %p264
    // Predicated region
    $region49: #{tpu_custom_call.1} parent=5 // pred_check
      _
    $region50: #{tpu_custom_call.1} parent=5 // pred_check_branch
      %267 = sbr.rel (%p264) target = $region52
    $region51: #{tpu_custom_call.1} parent=5 // pred_region
      %s268 = ssub.s32 %s14, 1
      %s269 = smul.u32 16, %s19
      %p270 = scmp.lt.s32.totalorder %s269, 63
      %s271 = scalar_select %p270, %s269, 63
      %s272 = smul.addr %s271, 8
      %s273 = scalar_lea.vmem %s0, %s272
      %p274 = pneg %p40
      %p275 = pneg %p37
      %p276 = pneg %p61
      %p277 = pneg %p58
      %p278 = pneg %p82
      %p279 = pneg %p79
      %p280 = pneg %p103
      %p281 = pneg %p100
      %p282 = pneg %p124
      %p283 = pneg %p121
      %p284 = pneg %p145
      %p285 = pneg %p142
      %p286 = pneg %p166
      %p287 = pneg %p163
      %p288 = pneg %p187
      %p289 = pneg %p184
      %p290 = pneg %p213
      %p291 = pneg %p210
      %s292 = smul.u32 16, %s19
      %p293 = scmp.lt.s32.totalorder %s292, 63
      %s294 = scalar_select %p293, %s292, 63
      %s295 = smul.addr %s294, 8
      %s296 = scalar_lea.vmem %s8, %s295
      %s297 = smul.u32 16, %s19
      %p298 = scmp.lt.s32.totalorder %s297, 63
      %s299 = scalar_select %p298, %s297, 63
      %s300 = smul.addr %s299, 8
      %s301 = scalar_lea.vmem %s0, %s300
      %s302 = smul.u32 16, %s19
      %s303 = smul.u32 16, %s19
      %p304 = scmp.lt.s32.totalorder %s303, 63
      %s305 = scalar_select %p304, %s303, 63
      %s306 = smul.addr %s305, 8
      %s307 = scalar_lea.vmem %s8, %s306
      %s308 = smul.u32 16, %s19
      %v309 = vld [vmem:[%s301] sm:$0xff]
      %v310 = vld [vmem:[%s301 + $0x8] sm:$0xff]
      %v311 = vld [vmem:[%s301 + $0x10] sm:$0xff]
      %v312 = vld [vmem:[%s301 + $0x18] sm:$0xff]
      %v313 = vld [vmem:[%s301 + $0x20] sm:$0xff]
      %v314 = vld [vmem:[%s301 + $0x28] sm:$0xff]
      %v315 = vld [vmem:[%s301 + $0x30] sm:$0xff]
      %v316 = vld [vmem:[%s301 + $0x38] sm:$0xff]
      %v317 = vld [vmem:[%s301 + $0x40] sm:$0xff]
      %v318 = vld [vmem:[%s301 + $0x48] sm:$0xff]
      %v319 = vld [vmem:[%s301 + $0x50] sm:$0xff]
      %v320 = vld [vmem:[%s301 + $0x58] sm:$0xff]
      %v321 = vld [vmem:[%s301 + $0x60] sm:$0xff]
      %v322 = vld [vmem:[%s301 + $0x68] sm:$0xff]
      %v323 = vld [vmem:[%s301 + $0x70] sm:$0xff]
      %v324 = vld [vmem:[%s301 + $0x78] sm:$0xff]
      %v325 = vld [vmem:[%s7] sm:$0x1]
      %v326 = vld [vmem:[%s1] sm:$0xff]
      %v327 = vld [vmem:[%s1 + $0x8] sm:$0xff]
      %v328 = vld [vmem:[%s1 + $0x10] sm:$0xff]
      %v329 = vld [vmem:[%s1 + $0x18] sm:$0xff]
      %v330 = vld [vmem:[%s1 + $0x20] sm:$0xff]
      %v331 = vld [vmem:[%s1 + $0x28] sm:$0xff]
      %v332 = vld [vmem:[%s1 + $0x30] sm:$0xff]
      %v333 = vld [vmem:[%s1 + $0x38] sm:$0xff]
      %v334 = vperm.slane %v325, 0
      %vm335 = vcmask 523264
      %v337 = vsel %vm335, %v309, 0
      %v340 = vsel %vm335, %v310, 0
      %v343 = vsel %vm335, %v311, 0
      %v346 = vsel %vm335, %v312, 0
      %v349 = vsel %vm335, %v313, 0
      %v352 = vsel %vm335, %v314, 0
      %v355 = vsel %vm335, %v315, 0
      %v358 = vsel %vm335, %v316, 0
      %v361 = vsel %vm335, %v317, 0
      %v364 = vsel %vm335, %v318, 0
      %v367 = vsel %vm335, %v319, 0
      %v370 = vsel %vm335, %v320, 0
      %v373 = vsel %vm335, %v321, 0
      %v376 = vsel %vm335, %v322, 0
      %v379 = vsel %vm335, %v323, 0
      %v382 = vsel %vm335, %v324, 0
      %384 = vmatpush.msra.mxu0 0.0
      %385 = vmatpush.msra.mxu0 0.0
      %386 = vmatpush.msra.mxu0 0.0
      %387 = vmatpush.msra.mxu0 0.0
      %388 = vmatpush.msra.mxu0 0.0
      %389 = vmatpush.msra.mxu0 0.0
      %390 = vmatpush.msra.mxu0 0.0
      %391 = vmatpush.msra.mxu0 0.0
      %392 = vmatpush.msra.mxu0 %v333
      %393 = vmatpush.msra.mxu0 %v332
      %394 = vmatpush.msra.mxu0 %v331
      %395 = vmatpush.msra.mxu0 %v330
      %396 = vmatpush.msra.mxu0 %v329
      %397 = vmatpush.msra.mxu0 %v328
      %398 = vmatpush.msra.mxu0 %v327
      %399 = vmatpush.msra.mxu0 %v326
      %400 = vmatmul.f32.gmra.mxu0 %v337
      %v401 = vpop.f32.mrf.mxu0
      %v402 = vadd.f32 %v334, %v401
      %403 = vmatmul.f32.gmra.mxu0 %v340
      %v404 = vpop.f32.mrf.mxu0
      %v405 = vadd.f32 %v334, %v404
      %406 = vmatmul.f32.gmra.mxu0 %v343
      %v407 = vpop.f32.mrf.mxu0
      %v408 = vadd.f32 %v334, %v407
      %409 = vmatmul.f32.gmra.mxu0 %v346
      %v410 = vpop.f32.mrf.mxu0
      %v411 = vadd.f32 %v334, %v410
      %412 = vmatmul.f32.gmra.mxu0 %v349
      %v413 = vpop.f32.mrf.mxu0
      %v414 = vadd.f32 %v334, %v413
      %415 = vmatmul.f32.gmra.mxu0 %v352
      %v416 = vpop.f32.mrf.mxu0
      %v417 = vadd.f32 %v334, %v416
      %418 = vmatmul.f32.gmra.mxu0 %v355
      %v419 = vpop.f32.mrf.mxu0
      %v420 = vadd.f32 %v334, %v419
      %421 = vmatmul.f32.gmra.mxu0 %v358
      %v422 = vpop.f32.mrf.mxu0
      %v423 = vadd.f32 %v334, %v422
      %424 = vmatmul.f32.gmra.mxu0 %v361
      %v425 = vpop.f32.mrf.mxu0
      %v426 = vadd.f32 %v334, %v425
      %427 = vmatmul.f32.gmra.mxu0 %v364
      %v428 = vpop.f32.mrf.mxu0
      %v429 = vadd.f32 %v334, %v428
      %430 = vmatmul.f32.gmra.mxu0 %v367
      %v431 = vpop.f32.mrf.mxu0
      %v432 = vadd.f32 %v334, %v431
      %433 = vmatmul.f32.gmra.mxu0 %v370
      %v434 = vpop.f32.mrf.mxu0
      %v435 = vadd.f32 %v334, %v434
      %436 = vmatmul.f32.gmra.mxu0 %v373
      %v437 = vpop.f32.mrf.mxu0
      %v438 = vadd.f32 %v334, %v437
      %439 = vmatmul.f32.gmra.mxu0 %v376
      %v440 = vpop.f32.mrf.mxu0
      %v441 = vadd.f32 %v334, %v440
      %442 = vmatmul.f32.gmra.mxu0 %v379
      %v443 = vpop.f32.mrf.mxu0
      %v444 = vadd.f32 %v334, %v443
      %445 = vmatmul.f32.gmra.mxu0 %v382
      %v446 = vpop.f32.mrf.mxu0
      %v447 = vadd.f32 %v334, %v446
      %448 = vdwg.mxu0
      %v449 = vmax.f32 %v402, 0.0
      %v450 = vmax.f32 %v405, 0.0
      %v451 = vmax.f32 %v408, 0.0
      %v452 = vmax.f32 %v411, 0.0
      %v453 = vmax.f32 %v414, 0.0
      %v454 = vmax.f32 %v417, 0.0
      %v455 = vmax.f32 %v420, 0.0
      %v456 = vmax.f32 %v423, 0.0
      %v457 = vmax.f32 %v426, 0.0
      %v458 = vmax.f32 %v429, 0.0
      %v459 = vmax.f32 %v432, 0.0
      %v460 = vmax.f32 %v435, 0.0
      %v461 = vmax.f32 %v438, 0.0
      %v462 = vmax.f32 %v441, 0.0
      %v463 = vmax.f32 %v444, 0.0
      %v464 = vmax.f32 %v447, 0.0
      %v465 = vld [vmem:[%s7 + $0x1] sm:$0x1]
      %v466 = vld [vmem:[%s2] sm:$0xff]
      %v467 = vld [vmem:[%s2 + $0x8] sm:$0xff]
      %v468 = vld [vmem:[%s2 + $0x10] sm:$0xff]
      %v469 = vld [vmem:[%s2 + $0x18] sm:$0xff]
      %v470 = vperm.slane %v465, 0
      %vm471 = vcmask 261120
      %v473 = vsel %vm471, %v449, 0
      %v476 = vsel %vm471, %v450, 0
      %v479 = vsel %vm471, %v451, 0
      %v482 = vsel %vm471, %v452, 0
      %v485 = vsel %vm471, %v453, 0
      %v488 = vsel %vm471, %v454, 0
      %v491 = vsel %vm471, %v455, 0
      %v494 = vsel %vm471, %v456, 0
      %v497 = vsel %vm471, %v457, 0
      %v500 = vsel %vm471, %v458, 0
      %v503 = vsel %vm471, %v459, 0
      %v506 = vsel %vm471, %v460, 0
      %v509 = vsel %vm471, %v461, 0
      %v512 = vsel %vm471, %v462, 0
      %v515 = vsel %vm471, %v463, 0
      %v518 = vsel %vm471, %v464, 0
      %520 = vmatpush.msra.mxu0 0.0
      %521 = vmatpush.msra.mxu0 0.0
      %522 = vmatpush.msra.mxu0 0.0
      %523 = vmatpush.msra.mxu0 0.0
      %524 = vmatpush.msra.mxu0 0.0
      %525 = vmatpush.msra.mxu0 0.0
      %526 = vmatpush.msra.mxu0 0.0
      %527 = vmatpush.msra.mxu0 0.0
      %528 = vmatpush.msra.mxu0 0.0
      %529 = vmatpush.msra.mxu0 0.0
      %530 = vmatpush.msra.mxu0 0.0
      %531 = vmatpush.msra.mxu0 0.0
      %532 = vmatpush.msra.mxu0 %v469
      %533 = vmatpush.msra.mxu0 %v468
      %534 = vmatpush.msra.mxu0 %v467
      %535 = vmatpush.msra.mxu0 %v466
      %536 = vmatmul.f32.gmra.mxu0 %v473
      %v537 = vpop.f32.mrf.mxu0
      %v538 = vadd.f32 %v470, %v537
      %539 = vmatmul.f32.gmra.mxu0 %v476
      %v540 = vpop.f32.mrf.mxu0
      %v541 = vadd.f32 %v470, %v540
      %542 = vmatmul.f32.gmra.mxu0 %v479
      %v543 = vpop.f32.mrf.mxu0
      %v544 = vadd.f32 %v470, %v543
      %545 = vmatmul.f32.gmra.mxu0 %v482
      %v546 = vpop.f32.mrf.mxu0
      %v547 = vadd.f32 %v470, %v546
      %548 = vmatmul.f32.gmra.mxu0 %v485
      %v549 = vpop.f32.mrf.mxu0
      %v550 = vadd.f32 %v470, %v549
      %551 = vmatmul.f32.gmra.mxu0 %v488
      %v552 = vpop.f32.mrf.mxu0
      %v553 = vadd.f32 %v470, %v552
      %554 = vmatmul.f32.gmra.mxu0 %v491
      %v555 = vpop.f32.mrf.mxu0
      %v556 = vadd.f32 %v470, %v555
      %557 = vmatmul.f32.gmra.mxu0 %v494
      %v558 = vpop.f32.mrf.mxu0
      %v559 = vadd.f32 %v470, %v558
      %560 = vmatmul.f32.gmra.mxu0 %v497
      %v561 = vpop.f32.mrf.mxu0
      %v562 = vadd.f32 %v470, %v561
      %563 = vmatmul.f32.gmra.mxu0 %v500
      %v564 = vpop.f32.mrf.mxu0
      %v565 = vadd.f32 %v470, %v564
      %566 = vmatmul.f32.gmra.mxu0 %v503
      %v567 = vpop.f32.mrf.mxu0
      %v568 = vadd.f32 %v470, %v567
      %569 = vmatmul.f32.gmra.mxu0 %v506
      %v570 = vpop.f32.mrf.mxu0
      %v571 = vadd.f32 %v470, %v570
      %572 = vmatmul.f32.gmra.mxu0 %v509
      %v573 = vpop.f32.mrf.mxu0
      %v574 = vadd.f32 %v470, %v573
      %575 = vmatmul.f32.gmra.mxu0 %v512
      %v576 = vpop.f32.mrf.mxu0
      %v577 = vadd.f32 %v470, %v576
      %578 = vmatmul.f32.gmra.mxu0 %v515
      %v579 = vpop.f32.mrf.mxu0
      %v580 = vadd.f32 %v470, %v579
      %581 = vmatmul.f32.gmra.mxu0 %v518
      %v582 = vpop.f32.mrf.mxu0
      %v583 = vadd.f32 %v470, %v582
      %584 = vdwg.mxu0
      %v585 = vmax.f32 %v538, 0.0
      %v586 = vmax.f32 %v541, 0.0
      %v587 = vmax.f32 %v544, 0.0
      %v588 = vmax.f32 %v547, 0.0
      %v589 = vmax.f32 %v550, 0.0
      %v590 = vmax.f32 %v553, 0.0
      %v591 = vmax.f32 %v556, 0.0
      %v592 = vmax.f32 %v559, 0.0
      %v593 = vmax.f32 %v562, 0.0
      %v594 = vmax.f32 %v565, 0.0
      %v595 = vmax.f32 %v568, 0.0
      %v596 = vmax.f32 %v571, 0.0
      %v597 = vmax.f32 %v574, 0.0
      %v598 = vmax.f32 %v577, 0.0
      %v599 = vmax.f32 %v580, 0.0
      %v600 = vmax.f32 %v583, 0.0
      %v601 = vld [vmem:[%s7 + $0x2] sm:$0x1]
      %v602 = vld [vmem:[%s3] sm:$0xff]
      %v603 = vld [vmem:[%s3 + $0x8] sm:$0xff]
      %v604 = vperm.slane %v601, 0
      %vm605 = vcmask 130048
      %v607 = vsel %vm605, %v585, 0
      %v610 = vsel %vm605, %v586, 0
      %v613 = vsel %vm605, %v587, 0
      %v616 = vsel %vm605, %v588, 0
      %v619 = vsel %vm605, %v589, 0
      %v622 = vsel %vm605, %v590, 0
      %v625 = vsel %vm605, %v591, 0
      %v628 = vsel %vm605, %v592, 0
      %v631 = vsel %vm605, %v593, 0
      %v634 = vsel %vm605, %v594, 0
      %v637 = vsel %vm605, %v595, 0
      %v640 = vsel %vm605, %v596, 0
      %v643 = vsel %vm605, %v597, 0
      %v646 = vsel %vm605, %v598, 0
      %v649 = vsel %vm605, %v599, 0
      %v652 = vsel %vm605, %v600, 0
      %654 = vmatpush.msra.mxu0 0.0
      %655 = vmatpush.msra.mxu0 0.0
      %656 = vmatpush.msra.mxu0 0.0
      %657 = vmatpush.msra.mxu0 0.0
      %658 = vmatpush.msra.mxu0 0.0
      %659 = vmatpush.msra.mxu0 0.0
      %660 = vmatpush.msra.mxu0 0.0
      %661 = vmatpush.msra.mxu0 0.0
      %662 = vmatpush.msra.mxu0 0.0
      %663 = vmatpush.msra.mxu0 0.0
      %664 = vmatpush.msra.mxu0 0.0
      %665 = vmatpush.msra.mxu0 0.0
      %666 = vmatpush.msra.mxu0 0.0
      %667 = vmatpush.msra.mxu0 0.0
      %668 = vmatpush.msra.mxu0 %v603
      %669 = vmatpush.msra.mxu0 %v602
      %670 = vmatmul.f32.gmra.mxu0 %v607
      %v671 = vpop.f32.mrf.mxu0
      %v672 = vadd.f32 %v604, %v671
      %673 = vmatmul.f32.gmra.mxu0 %v610
      %v674 = vpop.f32.mrf.mxu0
      %v675 = vadd.f32 %v604, %v674
      %676 = vmatmul.f32.gmra.mxu0 %v613
      %v677 = vpop.f32.mrf.mxu0
      %v678 = vadd.f32 %v604, %v677
      %679 = vmatmul.f32.gmra.mxu0 %v616
      %v680 = vpop.f32.mrf.mxu0
      %v681 = vadd.f32 %v604, %v680
      %682 = vmatmul.f32.gmra.mxu0 %v619
      %v683 = vpop.f32.mrf.mxu0
      %v684 = vadd.f32 %v604, %v683
      %685 = vmatmul.f32.gmra.mxu0 %v622
      %v686 = vpop.f32.mrf.mxu0
      %v687 = vadd.f32 %v604, %v686
      %688 = vmatmul.f32.gmra.mxu0 %v625
      %v689 = vpop.f32.mrf.mxu0
      %v690 = vadd.f32 %v604, %v689
      %691 = vmatmul.f32.gmra.mxu0 %v628
      %v692 = vpop.f32.mrf.mxu0
      %v693 = vadd.f32 %v604, %v692
      %694 = vmatmul.f32.gmra.mxu0 %v631
      %v695 = vpop.f32.mrf.mxu0
      %v696 = vadd.f32 %v604, %v695
      %697 = vmatmul.f32.gmra.mxu0 %v634
      %v698 = vpop.f32.mrf.mxu0
      %v699 = vadd.f32 %v604, %v698
      %700 = vmatmul.f32.gmra.mxu0 %v637
      %v701 = vpop.f32.mrf.mxu0
      %v702 = vadd.f32 %v604, %v701
      %703 = vmatmul.f32.gmra.mxu0 %v640
      %v704 = vpop.f32.mrf.mxu0
      %v705 = vadd.f32 %v604, %v704
      %706 = vmatmul.f32.gmra.mxu0 %v643
      %v707 = vpop.f32.mrf.mxu0
      %v708 = vadd.f32 %v604, %v707
      %709 = vmatmul.f32.gmra.mxu0 %v646
      %v710 = vpop.f32.mrf.mxu0
      %v711 = vadd.f32 %v604, %v710
      %712 = vmatmul.f32.gmra.mxu0 %v649
      %v713 = vpop.f32.mrf.mxu0
      %v714 = vadd.f32 %v604, %v713
      %715 = vmatmul.f32.gmra.mxu0 %v652
      %v716 = vpop.f32.mrf.mxu0
      %v717 = vadd.f32 %v604, %v716
      %718 = vdwg.mxu0
      %vm719 = vcmp.gt.f32.partialorder %v672, 0.0
      %vm720 = vcmp.gt.f32.partialorder %v675, 0.0
      %vm721 = vcmp.gt.f32.partialorder %v678, 0.0
      %vm722 = vcmp.gt.f32.partialorder %v681, 0.0
      %vm723 = vcmp.gt.f32.partialorder %v684, 0.0
      %vm724 = vcmp.gt.f32.partialorder %v687, 0.0
      %vm725 = vcmp.gt.f32.partialorder %v690, 0.0
      %vm726 = vcmp.gt.f32.partialorder %v693, 0.0
      %vm727 = vcmp.gt.f32.partialorder %v696, 0.0
      %vm728 = vcmp.gt.f32.partialorder %v699, 0.0
      %vm729 = vcmp.gt.f32.partialorder %v702, 0.0
      %vm730 = vcmp.gt.f32.partialorder %v705, 0.0
      %vm731 = vcmp.gt.f32.partialorder %v708, 0.0
      %vm732 = vcmp.gt.f32.partialorder %v711, 0.0
      %vm733 = vcmp.gt.f32.partialorder %v714, 0.0
      %vm734 = vcmp.gt.f32.partialorder %v717, 0.0
      %v735 = vmul.f32 %v672, 0.1
      %v736 = vmul.f32 %v675, 0.1
      %v737 = vmul.f32 %v678, 0.1
      %v738 = vmul.f32 %v681, 0.1
      %v739 = vmul.f32 %v684, 0.1
      %v740 = vmul.f32 %v687, 0.1
      %v741 = vmul.f32 %v690, 0.1
      %v742 = vmul.f32 %v693, 0.1
      %v743 = vmul.f32 %v696, 0.1
      %v744 = vmul.f32 %v699, 0.1
      %v745 = vmul.f32 %v702, 0.1
      %v746 = vmul.f32 %v705, 0.1
      %v747 = vmul.f32 %v708, 0.1
      %v748 = vmul.f32 %v711, 0.1
      %v749 = vmul.f32 %v714, 0.1
      %v750 = vmul.f32 %v717, 0.1
      %v751 = vsel %vm719, %v672, %v735
      %v752 = vsel %vm720, %v675, %v736
      %v753 = vsel %vm721, %v678, %v737
      %v754 = vsel %vm722, %v681, %v738
      %v755 = vsel %vm723, %v684, %v739
      %v756 = vsel %vm724, %v687, %v740
      %v757 = vsel %vm725, %v690, %v741
      %v758 = vsel %vm726, %v693, %v742
      %v759 = vsel %vm727, %v696, %v743
      %v760 = vsel %vm728, %v699, %v744
      %v761 = vsel %vm729, %v702, %v745
      %v762 = vsel %vm730, %v705, %v746
      %v763 = vsel %vm731, %v708, %v747
      %v764 = vsel %vm732, %v711, %v748
      %v765 = vsel %vm733, %v714, %v749
      %v766 = vsel %vm734, %v717, %v750
      %v767 = vld [vmem:[%s7 + $0x3] sm:$0x1]
      %v768 = vld [vmem:[%s4] sm:$0xf]
      %v769 = vperm.slane %v767, 0
      %vm770 = vcmask 31744
      %v772 = vsel %vm770, %v751, 0
      %v775 = vsel %vm770, %v752, 0
      %v778 = vsel %vm770, %v753, 0
      %v781 = vsel %vm770, %v754, 0
      %v784 = vsel %vm770, %v755, 0
      %v787 = vsel %vm770, %v756, 0
      %v790 = vsel %vm770, %v757, 0
      %v793 = vsel %vm770, %v758, 0
      %v796 = vsel %vm770, %v759, 0
      %v799 = vsel %vm770, %v760, 0
      %v802 = vsel %vm770, %v761, 0
      %v805 = vsel %vm770, %v762, 0
      %v808 = vsel %vm770, %v763, 0
      %v811 = vsel %vm770, %v764, 0
      %v814 = vsel %vm770, %v765, 0
      %v817 = vsel %vm770, %v766, 0
      %vm819 = vcmask 1043456
      %v821 = vsel %vm819, %v768, 0
      %823 = vmatpush.msra.mxu0 0.0
      %824 = vmatpush.msra.mxu0 0.0
      %825 = vmatpush.msra.mxu0 0.0
      %826 = vmatpush.msra.mxu0 0.0
      %827 = vmatpush.msra.mxu0 0.0
      %828 = vmatpush.msra.mxu0 0.0
      %829 = vmatpush.msra.mxu0 0.0
      %830 = vmatpush.msra.mxu0 0.0
      %831 = vmatpush.msra.mxu0 0.0
      %832 = vmatpush.msra.mxu0 0.0
      %833 = vmatpush.msra.mxu0 0.0
      %834 = vmatpush.msra.mxu0 0.0
      %835 = vmatpush.msra.mxu0 0.0
      %836 = vmatpush.msra.mxu0 0.0
      %837 = vmatpush.msra.mxu0 0.0
      %838 = vmatpush.msra.mxu0 %v821
      %839 = vmatmul.f32.gmra.mxu0 %v772
      %v840 = vpop.f32.mrf.mxu0
      %v841 = vadd.f32 %v769, %v840
      %842 = vmatmul.f32.gmra.mxu0 %v775
      %v843 = vpop.f32.mrf.mxu0
      %v844 = vadd.f32 %v769, %v843
      %845 = vmatmul.f32.gmra.mxu0 %v778
      %v846 = vpop.f32.mrf.mxu0
      %v847 = vadd.f32 %v769, %v846
      %848 = vmatmul.f32.gmra.mxu0 %v781
      %v849 = vpop.f32.mrf.mxu0
      %v850 = vadd.f32 %v769, %v849
      %851 = vmatmul.f32.gmra.mxu0 %v784
      %v852 = vpop.f32.mrf.mxu0
      %v853 = vadd.f32 %v769, %v852
      %854 = vmatmul.f32.gmra.mxu0 %v787
      %v855 = vpop.f32.mrf.mxu0
      %v856 = vadd.f32 %v769, %v855
      %857 = vmatmul.f32.gmra.mxu0 %v790
      %v858 = vpop.f32.mrf.mxu0
      %v859 = vadd.f32 %v769, %v858
      %860 = vmatmul.f32.gmra.mxu0 %v793
      %v861 = vpop.f32.mrf.mxu0
      %v862 = vadd.f32 %v769, %v861
      %863 = vmatmul.f32.gmra.mxu0 %v796
      %v864 = vpop.f32.mrf.mxu0
      %v865 = vadd.f32 %v769, %v864
      %866 = vmatmul.f32.gmra.mxu0 %v799
      %v867 = vpop.f32.mrf.mxu0
      %v868 = vadd.f32 %v769, %v867
      %869 = vmatmul.f32.gmra.mxu0 %v802
      %v870 = vpop.f32.mrf.mxu0
      %v871 = vadd.f32 %v769, %v870
      %872 = vmatmul.f32.gmra.mxu0 %v805
      %v873 = vpop.f32.mrf.mxu0
      %v874 = vadd.f32 %v769, %v873
      %875 = vmatmul.f32.gmra.mxu0 %v808
      %v876 = vpop.f32.mrf.mxu0
      %v877 = vadd.f32 %v769, %v876
      %878 = vmatmul.f32.gmra.mxu0 %v811
      %v879 = vpop.f32.mrf.mxu0
      %v880 = vadd.f32 %v769, %v879
      %881 = vmatmul.f32.gmra.mxu0 %v814
      %v882 = vpop.f32.mrf.mxu0
      %v883 = vadd.f32 %v769, %v882
      %884 = vmatmul.f32.gmra.mxu0 %v817
      %v885 = vpop.f32.mrf.mxu0
      %v886 = vadd.f32 %v769, %v885
      %887 = vdwg.mxu0
      %v888 = vmax.f32 %v841, 0.0
      %v889 = vmax.f32 %v844, 0.0
      %v890 = vmax.f32 %v847, 0.0
      %v891 = vmax.f32 %v850, 0.0
      %v892 = vmax.f32 %v853, 0.0
      %v893 = vmax.f32 %v856, 0.0
      %v894 = vmax.f32 %v859, 0.0
      %v895 = vmax.f32 %v862, 0.0
      %v896 = vmax.f32 %v865, 0.0
      %v897 = vmax.f32 %v868, 0.0
      %v898 = vmax.f32 %v871, 0.0
      %v899 = vmax.f32 %v874, 0.0
      %v900 = vmax.f32 %v877, 0.0
      %v901 = vmax.f32 %v880, 0.0
      %v902 = vmax.f32 %v883, 0.0
      %v903 = vmax.f32 %v886, 0.0
      %v904 = vld [vmem:[%s7 + $0x4] sm:$0x1]
      %v905 = vld [vmem:[%s5] sm:$0xff]
      %v906 = vld [vmem:[%s5 + $0x8] sm:$0xff]
      %v907 = vperm.slane %v904, 0
      %v909 = vsel %vm605, %v888, 0
      %v912 = vsel %vm605, %v889, 0
      %v915 = vsel %vm605, %v890, 0
      %v918 = vsel %vm605, %v891, 0
      %v921 = vsel %vm605, %v892, 0
      %v924 = vsel %vm605, %v893, 0
      %v927 = vsel %vm605, %v894, 0
      %v930 = vsel %vm605, %v895, 0
      %v933 = vsel %vm605, %v896, 0
      %v936 = vsel %vm605, %v897, 0
      %v939 = vsel %vm605, %v898, 0
      %v942 = vsel %vm605, %v899, 0
      %v945 = vsel %vm605, %v900, 0
      %v948 = vsel %vm605, %v901, 0
      %v951 = vsel %vm605, %v902, 0
      %v954 = vsel %vm605, %v903, 0
      %956 = vmatpush.msra.mxu0 0.0
      %957 = vmatpush.msra.mxu0 0.0
      %958 = vmatpush.msra.mxu0 0.0
      %959 = vmatpush.msra.mxu0 0.0
      %960 = vmatpush.msra.mxu0 0.0
      %961 = vmatpush.msra.mxu0 0.0
      %962 = vmatpush.msra.mxu0 0.0
      %963 = vmatpush.msra.mxu0 0.0
      %964 = vmatpush.msra.mxu0 0.0
      %965 = vmatpush.msra.mxu0 0.0
      %966 = vmatpush.msra.mxu0 0.0
      %967 = vmatpush.msra.mxu0 0.0
      %968 = vmatpush.msra.mxu0 0.0
      %969 = vmatpush.msra.mxu0 0.0
      %970 = vmatpush.msra.mxu0 %v906
      %971 = vmatpush.msra.mxu0 %v905
      %972 = vmatmul.f32.gmra.mxu0 %v909
      %v973 = vpop.f32.mrf.mxu0
      %v974 = vadd.f32 %v907, %v973
      %975 = vmatmul.f32.gmra.mxu0 %v912
      %v976 = vpop.f32.mrf.mxu0
      %v977 = vadd.f32 %v907, %v976
      %978 = vmatmul.f32.gmra.mxu0 %v915
      %v979 = vpop.f32.mrf.mxu0
      %v980 = vadd.f32 %v907, %v979
      %981 = vmatmul.f32.gmra.mxu0 %v918
      %v982 = vpop.f32.mrf.mxu0
      %v983 = vadd.f32 %v907, %v982
      %984 = vmatmul.f32.gmra.mxu0 %v921
      %v985 = vpop.f32.mrf.mxu0
      %v986 = vadd.f32 %v907, %v985
      %987 = vmatmul.f32.gmra.mxu0 %v924
      %v988 = vpop.f32.mrf.mxu0
      %v989 = vadd.f32 %v907, %v988
      %990 = vmatmul.f32.gmra.mxu0 %v927
      %v991 = vpop.f32.mrf.mxu0
      %v992 = vadd.f32 %v907, %v991
      %993 = vmatmul.f32.gmra.mxu0 %v930
      %v994 = vpop.f32.mrf.mxu0
      %v995 = vadd.f32 %v907, %v994
      %996 = vmatmul.f32.gmra.mxu0 %v933
      %v997 = vpop.f32.mrf.mxu0
      %v998 = vadd.f32 %v907, %v997
      %999 = vmatmul.f32.gmra.mxu0 %v936
      %v1000 = vpop.f32.mrf.mxu0
      %v1001 = vadd.f32 %v907, %v1000
      %1002 = vmatmul.f32.gmra.mxu0 %v939
      %v1003 = vpop.f32.mrf.mxu0
      %v1004 = vadd.f32 %v907, %v1003
      %1005 = vmatmul.f32.gmra.mxu0 %v942
      %v1006 = vpop.f32.mrf.mxu0
      %v1007 = vadd.f32 %v907, %v1006
      %1008 = vmatmul.f32.gmra.mxu0 %v945
      %v1009 = vpop.f32.mrf.mxu0
      %v1010 = vadd.f32 %v907, %v1009
      %1011 = vmatmul.f32.gmra.mxu0 %v948
      %v1012 = vpop.f32.mrf.mxu0
      %v1013 = vadd.f32 %v907, %v1012
      %1014 = vmatmul.f32.gmra.mxu0 %v951
      %v1015 = vpop.f32.mrf.mxu0
      %v1016 = vadd.f32 %v907, %v1015
      %1017 = vmatmul.f32.gmra.mxu0 %v954
      %v1018 = vpop.f32.mrf.mxu0
      %v1019 = vadd.f32 %v907, %v1018
      %1020 = vdwg.mxu0
      %v1021 = vmax.f32 %v974, 0.0
      %v1022 = vmax.f32 %v977, 0.0
      %v1023 = vmax.f32 %v980, 0.0
      %v1024 = vmax.f32 %v983, 0.0
      %v1025 = vmax.f32 %v986, 0.0
      %v1026 = vmax.f32 %v989, 0.0
      %v1027 = vmax.f32 %v992, 0.0
      %v1028 = vmax.f32 %v995, 0.0
      %v1029 = vmax.f32 %v998, 0.0
      %v1030 = vmax.f32 %v1001, 0.0
      %v1031 = vmax.f32 %v1004, 0.0
      %v1032 = vmax.f32 %v1007, 0.0
      %v1033 = vmax.f32 %v1010, 0.0
      %v1034 = vmax.f32 %v1013, 0.0
      %v1035 = vmax.f32 %v1016, 0.0
      %v1036 = vmax.f32 %v1019, 0.0
      %v1037 = vld [vmem:[%s7 + $0x5] sm:$0x1]
      %v1038 = vld [vmem:[%s6] sm:$0xff]
      %v1039 = vld [vmem:[%s6 + $0x8] sm:$0xff]
      %v1040 = vld [vmem:[%s6 + $0x10] sm:$0xff]
      %v1041 = vld [vmem:[%s6 + $0x18] sm:$0xff]
      %v1042 = vperm.slane %v1037, 0
      %v1044 = vsel %vm471, %v1021, 0
      %v1047 = vsel %vm471, %v1022, 0
      %v1050 = vsel %vm471, %v1023, 0
      %v1053 = vsel %vm471, %v1024, 0
      %v1056 = vsel %vm471, %v1025, 0
      %v1059 = vsel %vm471, %v1026, 0
      %v1062 = vsel %vm471, %v1027, 0
      %v1065 = vsel %vm471, %v1028, 0
      %v1068 = vsel %vm471, %v1029, 0
      %v1071 = vsel %vm471, %v1030, 0
      %v1074 = vsel %vm471, %v1031, 0
      %v1077 = vsel %vm471, %v1032, 0
      %v1080 = vsel %vm471, %v1033, 0
      %v1083 = vsel %vm471, %v1034, 0
      %v1086 = vsel %vm471, %v1035, 0
      %v1089 = vsel %vm471, %v1036, 0
      %1091 = vmatpush.msra.mxu0 0.0
      %1092 = vmatpush.msra.mxu0 0.0
      %1093 = vmatpush.msra.mxu0 0.0
      %1094 = vmatpush.msra.mxu0 0.0
      %1095 = vmatpush.msra.mxu0 0.0
      %1096 = vmatpush.msra.mxu0 0.0
      %1097 = vmatpush.msra.mxu0 0.0
      %1098 = vmatpush.msra.mxu0 0.0
      %1099 = vmatpush.msra.mxu0 0.0
      %1100 = vmatpush.msra.mxu0 0.0
      %1101 = vmatpush.msra.mxu0 0.0
      %1102 = vmatpush.msra.mxu0 0.0
      %1103 = vmatpush.msra.mxu0 %v1041
      %1104 = vmatpush.msra.mxu0 %v1040
      %1105 = vmatpush.msra.mxu0 %v1039
      %1106 = vmatpush.msra.mxu0 %v1038
      %1107 = vmatmul.f32.gmra.mxu0 %v1044
      %v1108 = vpop.f32.mrf.mxu0
      %v1109 = vadd.f32 %v1042, %v1108
      %1110 = vmatmul.f32.gmra.mxu0 %v1047
      %v1111 = vpop.f32.mrf.mxu0
      %v1112 = vadd.f32 %v1042, %v1111
      %1113 = vmatmul.f32.gmra.mxu0 %v1050
      %v1114 = vpop.f32.mrf.mxu0
      %v1115 = vadd.f32 %v1042, %v1114
      %1116 = vmatmul.f32.gmra.mxu0 %v1053
      %v1117 = vpop.f32.mrf.mxu0
      %v1118 = vadd.f32 %v1042, %v1117
      %1119 = vmatmul.f32.gmra.mxu0 %v1056
      %v1120 = vpop.f32.mrf.mxu0
      %v1121 = vadd.f32 %v1042, %v1120
      %1122 = vmatmul.f32.gmra.mxu0 %v1059
      %v1123 = vpop.f32.mrf.mxu0
      %v1124 = vadd.f32 %v1042, %v1123
      %1125 = vmatmul.f32.gmra.mxu0 %v1062
      %v1126 = vpop.f32.mrf.mxu0
      %v1127 = vadd.f32 %v1042, %v1126
      %1128 = vmatmul.f32.gmra.mxu0 %v1065
      %v1129 = vpop.f32.mrf.mxu0
      %v1130 = vadd.f32 %v1042, %v1129
      %1131 = vmatmul.f32.gmra.mxu0 %v1068
      %v1132 = vpop.f32.mrf.mxu0
      %v1133 = vadd.f32 %v1042, %v1132
      %1134 = vmatmul.f32.gmra.mxu0 %v1071
      %v1135 = vpop.f32.mrf.mxu0
      %v1136 = vadd.f32 %v1042, %v1135
      %1137 = vmatmul.f32.gmra.mxu0 %v1074
      %v1138 = vpop.f32.mrf.mxu0
      %v1139 = vadd.f32 %v1042, %v1138
      %1140 = vmatmul.f32.gmra.mxu0 %v1077
      %v1141 = vpop.f32.mrf.mxu0
      %v1142 = vadd.f32 %v1042, %v1141
      %1143 = vmatmul.f32.gmra.mxu0 %v1080
      %v1144 = vpop.f32.mrf.mxu0
      %v1145 = vadd.f32 %v1042, %v1144
      %1146 = vmatmul.f32.gmra.mxu0 %v1083
      %v1147 = vpop.f32.mrf.mxu0
      %v1148 = vadd.f32 %v1042, %v1147
      %1149 = vmatmul.f32.gmra.mxu0 %v1086
      %v1150 = vpop.f32.mrf.mxu0
      %v1151 = vadd.f32 %v1042, %v1150
      %1152 = vmatmul.f32.gmra.mxu0 %v1089
      %v1153 = vpop.f32.mrf.mxu0
      %v1154 = vadd.f32 %v1042, %v1153
      %1155 = vdwg.mxu0
      %v1156 = vtanh.pop %v1109
      %v1157 = vtanh.pop %v1112
      %v1158 = vtanh.pop %v1115
      %v1159 = vtanh.pop %v1118
      %v1160 = vtanh.pop %v1121
      %v1161 = vtanh.pop %v1124
      %v1162 = vtanh.pop %v1127
      %v1163 = vtanh.pop %v1130
      %v1164 = vtanh.pop %v1133
      %v1165 = vtanh.pop %v1136
      %v1166 = vtanh.pop %v1139
      %v1167 = vtanh.pop %v1142
      %v1168 = vtanh.pop %v1145
      %v1169 = vtanh.pop %v1148
      %v1170 = vtanh.pop %v1151
      %v1171 = vtanh.pop %v1154
      %1172 = vst.msk [vmem:[%s307] sm:$0xff] %vm335, %v1156
      %1173 = vst.msk [vmem:[%s307 + $0x8] sm:$0xff] %vm335, %v1157
      %1174 = vst.msk [vmem:[%s307 + $0x10] sm:$0xff] %vm335, %v1158
      %1175 = vst.msk [vmem:[%s307 + $0x18] sm:$0xff] %vm335, %v1159
      %1176 = vst.msk [vmem:[%s307 + $0x20] sm:$0xff] %vm335, %v1160
      %1177 = vst.msk [vmem:[%s307 + $0x28] sm:$0xff] %vm335, %v1161
      %1178 = vst.msk [vmem:[%s307 + $0x30] sm:$0xff] %vm335, %v1162
      %1179 = vst.msk [vmem:[%s307 + $0x38] sm:$0xff] %vm335, %v1163
      %1180 = vst.msk [vmem:[%s307 + $0x40] sm:$0xff] %vm335, %v1164
      %1181 = vst.msk [vmem:[%s307 + $0x48] sm:$0xff] %vm335, %v1165
      %1182 = vst.msk [vmem:[%s307 + $0x50] sm:$0xff] %vm335, %v1166
      %1183 = vst.msk [vmem:[%s307 + $0x58] sm:$0xff] %vm335, %v1167
      %1184 = vst.msk [vmem:[%s307 + $0x60] sm:$0xff] %vm335, %v1168
      %1185 = vst.msk [vmem:[%s307 + $0x68] sm:$0xff] %vm335, %v1169
      %1186 = vst.msk [vmem:[%s307 + $0x70] sm:$0xff] %vm335, %v1170
      %1187 = vst.msk [vmem:[%s307 + $0x78] sm:$0xff] %vm335, %v1171
      %s1188 = smul.u32 16, %s19
      %p1189 = scmp.lt.s32.totalorder %s1188, 63
      %s1190 = scalar_select %p1189, %s1188, 63
      %s1191 = smul.addr %s1190, 8
      %s1192 = scalar_lea.vmem %s8, %s1191
      // Predicated region
      $region53: #{tpu_custom_call.1} parent=51 // pred_check
        %p1193 = pneg %p210
      $region54: #{tpu_custom_call.1} parent=51 // pred_check_branch
        %1195 = sbr.rel (%p1193) target = $region56
      $region55: #{tpu_custom_call.1} parent=51 // pred_region
        %s1196 = smul.u32 16, %s19
      $region56: #{tpu_custom_call.1} parent=51 // pred_fallthru
        _
    $region52: #{tpu_custom_call.1} parent=5 // pred_fallthru
      _
    %p1197 = scmp.le.s32.totalorder 2, %s14
    // Predicated region
    $region57: #{tpu_custom_call.1} parent=5 // pred_check
      %p1198 = pneg %p1197
    $region58: #{tpu_custom_call.1} parent=5 // pred_check_branch
      %1200 = sbr.rel (%p1198) target = $region60
    $region59: #{tpu_custom_call.1} parent=5 // pred_region
      %s1201 = ssub.s32 %s14, 2
      // Predicated region
      $region61: #{tpu_custom_call.1} parent=59 // pred_check
        %p1202 = pneg %p216
      $region62: #{tpu_custom_call.1} parent=59 // pred_check_branch
        %1204 = sbr.rel (%p1202) target = $region64
      $region63: #{tpu_custom_call.1} parent=59 // pred_region
        %s1205 = smul.u32 16, %s20
        %p1206 = scmp.lt.s32.totalorder %s1205, 63
        %s1207 = scalar_select %p1206, %s1205, 63
        %s1208 = smul.addr %s1207, 8
        %s1209 = scalar_lea.vmem %s8, %s1208
      $region64: #{tpu_custom_call.1} parent=59 // pred_fallthru
        _
    $region60: #{tpu_custom_call.1} parent=5 // pred_fallthru
      _
  $region6: #{tpu_custom_call.1} parent=0 // loop_footer
    %s18 = sadd.s32 1, %s14
  $region7: #{tpu_custom_call.1} parent=0 // loop_footer_branch
    %13 = sbr.rel target = $region3
  $region8: #{tpu_custom_call.1} parent=0 // loop_exit
    _

</llo_original>
